<compile_context>
chip_gen: v7x
topology: tpu7x:2x2x1
jax: 0.10.0
libtpu: 0.0.40
codegen_flags: <defaults>
</compile_context>

<pallas_src>
import jax
import jax.numpy as jnp
from jax.experimental import pallas as pl
from jax.experimental.pallas import tpu as pltpu

HIST_DIM = 512
CLIN_DIM = 16
COMMON = 128
H1 = 256
H2 = 128
NUM_CLASSES = 3
OUT_PAD = 128          # lane-dense output width; real logits are [:, :NUM_CLASSES]
BN_EPS = 1e-5

# small vectors packed into one (1, VEC_LEN) f32 buffer, 128-lane-aligned segments
_VEC_SEGMENTS = [
    ("const_h", HIST_DIM), ("const_c", CLIN_DIM),
    ("hgw", HIST_DIM), ("hgb", 1), ("cgw", CLIN_DIM), ("cgb", 1),
    ("b1", H1), ("b2f", H2), ("b3p", OUT_PAD),
]


def _round_up(x, m):
    return (x + m - 1) // m * m


VEC_OFFSETS = {}
_off = 0
for _name, _width in _VEC_SEGMENTS:
    VEC_OFFSETS[_name] = (_off, _width)
    _off += _round_up(_width, 128)      # keep every segment lane-aligned
VEC_LEN = _off


def pack_vec(values):
    vec = jnp.zeros((1, VEC_LEN), jnp.float32)
    for name, (off, width) in VEC_OFFSETS.items():
        vec = vec.at[:, off:off + width].set(
            values[name].astype(jnp.float32).reshape(1, width))
    return vec


def prepare_params(params):
    """Fold attention chain + BatchNorms offline (f32), pack weights/vectors for the kernel."""
    f32, bf16 = jnp.float32, jnp.bfloat16
    p = {k: v.astype(f32) for k, v in params.items()}

    # ---- fold seq-len-1 attention chain (purely linear) ----
    vw_o = p["wv"] @ p["wo"]                                   # (128, 128)
    A_h = p["cpw"] @ vw_o @ p["how"]                           # (16, 512)
    A_c = p["hpw"] @ vw_o @ p["cow"]                           # (512, 16)
    const_h = (((p["cpb"] @ p["wv"] + p["bv"]) @ p["wo"]) + p["bo"]) @ p["how"] + p["hob"]
    const_c = (((p["hpb"] @ p["wv"] + p["bv"]) @ p["wo"]) + p["bo"]) @ p["cow"] + p["cob"]

    # ---- fold eval-mode BatchNorms into the following linear layers ----
    w2f = p["w2"] * p["bn1s"].reshape(H1, 1)                   # (256, 128)
    b2f = p["b2"] + p["bn1t"] @ p["w2"]                        # (1, 128)
    w3f = p["w3"] * p["bn2s"].reshape(H2, 1)                   # (128, 3)
    b3f = p["b3"] + p["bn2t"] @ p["w3"]                        # (1, 3)

    # ---- lane-dense output: zero-pad last layer to 128 output lanes ----
    w3p = jnp.zeros((H2, OUT_PAD), f32).at[:, :NUM_CLASSES].set(w3f)
    b3p = jnp.zeros((1, OUT_PAD), f32).at[:, :NUM_CLASSES].set(b3f)

    # ---- pack bf16 weight buffers, grouped by inner (K) dimension ----
    wk512 = jnp.concatenate([p["w1h"], A_c], axis=1).astype(bf16)    # (512, 256+16)
    wk16 = jnp.concatenate([A_h, p["w1c"]], axis=1).astype(bf16)     # (16, 512+256)
    w23 = jnp.concatenate([w2f, w3p], axis=0).astype(bf16)           # (256+128, 128)

    vec = pack_vec({
        "const_h": const_h, "const_c": const_c,
        "hgw": p["hgw"], "hgb": p["hgb"], "cgw": p["cgw"], "cgb": p["cgb"],
        "b1": p["b1"], "b2f": b2f, "b3p": b3p,
    })
    return wk512, wk16, w23, vec


def fusion_kernel(hist_ref, clin_ref, wk512_ref, wk16_ref, w23_ref, vec_ref, out_ref):
    f32 = jnp.float32
    bf16 = jnp.bfloat16

    hist = hist_ref[...]            # (TB, 512) f32
    clin = clin_ref[...]            # (TB, 16) f32

    def seg(name):
        off, width = VEC_OFFSETS[name]
        return vec_ref[:, off:off + width]          # static, lane-aligned slice

    # static, aligned slices out of the packed weight buffers
    w1h = wk512_ref[:, 0:H1]                        # (512, 256)
    A_c = wk512_ref[:, H1:H1 + CLIN_DIM]            # (512, 16)
    A_h = wk16_ref[:, 0:HIST_DIM]                   # (16, 512)
    w1c = wk16_ref[:, HIST_DIM:HIST_DIM + H1]       # (16, 256)
    w2f = w23_ref[0:H1, :]                          # (256, 128)
    w3p = w23_ref[H1:H1 + H2, :]                    # (128, 128)

    # ---------------- folded CrossModalAttention (seq_len == 1) ----------------
    hist_att = jnp.dot(clin.astype(bf16), A_h, preferred_element_type=f32) + seg("const_h")
    clin_att = jnp.dot(hist.astype(bf16), A_c, preferred_element_type=f32) + seg("const_c")
    hist_final = hist + hist_att                    # (TB, 512)
    clin_final = clin + clin_att                    # (TB, 16)

    # ---------------- modality gates: Linear(d, 1) + Sigmoid ----------------
    # lane reductions (XLU) instead of degenerate N=1 matmuls; exp → EUP
    hz = jnp.sum(hist_final * seg("hgw"), axis=-1, keepdims=True) + seg("hgb")
    cz = jnp.sum(clin_final * seg("cgw"), axis=-1, keepdims=True) + seg("cgb")
    hist_w = hist_final * jax.nn.sigmoid(hz)
    clin_w = clin_final * jax.nn.sigmoid(cz)

    # ---------------- fusion MLP (BatchNorms folded into w2f / w3p) ----------------
    # concat([hist_w, clin_w], 1) @ W1 == hist_w @ W1[:512] + clin_w @ W1[512:]
    x = (jnp.dot(hist_w.astype(bf16), w1h, preferred_element_type=f32)
         + jnp.dot(clin_w.astype(bf16), w1c, preferred_element_type=f32)
         + seg("b1"))
    x = jnp.maximum(x, 0.0)                         # ReLU   (BN1 folded into w2f/b2f)
    # Dropout(0.4): identity in eval mode
    x = jnp.dot(x.astype(bf16), w2f, preferred_element_type=f32) + seg("b2f")
    x = jnp.maximum(x, 0.0)                         # ReLU   (BN2 folded into w3p/b3p)
    # Dropout(0.3): identity in eval mode
    logits = jnp.dot(x.astype(bf16), w3p, preferred_element_type=f32) + seg("b3p")

    out_ref[...] = logits.astype(out_ref.dtype)     # lane-dense (TB, 128) store


def init_params(key):
    shapes = {
        "hpw": (HIST_DIM, COMMON), "hpb": (1, COMMON),
        "cpw": (CLIN_DIM, COMMON), "cpb": (1, COMMON),
        "wv": (COMMON, COMMON), "bv": (1, COMMON),        # value slice of in_proj
        "wo": (COMMON, COMMON), "bo": (1, COMMON),        # attention out_proj
        "how": (COMMON, HIST_DIM), "hob": (1, HIST_DIM),
        "cow": (COMMON, CLIN_DIM), "cob": (1, CLIN_DIM),
        "hgw": (1, HIST_DIM), "hgb": (1, 1),              # gates as (1, d) rows
        "cgw": (1, CLIN_DIM), "cgb": (1, 1),
        "w1h": (HIST_DIM, H1), "w1c": (CLIN_DIM, H1), "b1": (1, H1),
        "w2": (H1, H2), "b2": (1, H2),
        "w3": (H2, NUM_CLASSES), "b3": (1, NUM_CLASSES),
    }
    keys = jax.random.split(key, len(shapes))
    params = {n: jax.random.normal(k, s, jnp.float32) * 0.05
              for (n, s), k in zip(shapes.items(), keys)}

    # BatchNorm1d eval: gamma=1, beta=0, running_mean=0, running_var=1 (PyTorch init)
    def bn_fold(dim):
        gamma = jnp.ones((1, dim), jnp.float32)
        beta = jnp.zeros((1, dim), jnp.float32)
        r_mean = jnp.zeros((1, dim), jnp.float32)
        r_var = jnp.ones((1, dim), jnp.float32)
        scale = gamma / jnp.sqrt(r_var + BN_EPS)
        shift = beta - r_mean * scale
        return scale, shift

    params["bn1s"], params["bn1t"] = bn_fold(H1)
    params["bn2s"], params["bn2t"] = bn_fold(H2)
    return params


def multimodal_fusion_forward(histology_features, clinical_features,
                              wk512, wk16, w23, vec, *, block_b=512):
    # Single TC (v5e/v6e): one big block per step amortizes the ~0.35 µs grid-step cost.
    # On v7x with large B, pick block_b ~= round_up(cdiv(B, 2), 8) so both TCs get work.
    B = histology_features.shape[0]
    TB = B if B <= block_b else block_b
    grid = (pl.cdiv(B, TB),)

    out_padded = pl.pallas_call(
        fusion_kernel,
        grid=grid,
        in_specs=[
            pl.BlockSpec((TB, HIST_DIM), lambda i: (i, 0)),
            pl.BlockSpec((TB, CLIN_DIM), lambda i: (i, 0)),
            pl.BlockSpec(wk512.shape, lambda i: (0, 0)),   # resident across grid steps
            pl.BlockSpec(wk16.shape, lambda i: (0, 0)),
            pl.BlockSpec(w23.shape, lambda i: (0, 0)),
            pl.BlockSpec(vec.shape, lambda i: (0, 0)),
        ],
        out_specs=pl.BlockSpec((TB, OUT_PAD), lambda i: (i, 0)),
        out_shape=jax.ShapeDtypeStruct((B, OUT_PAD), jnp.float32),
        compiler_params=pltpu.CompilerParams(
            dimension_semantics=("parallel",)),
    )(histology_features, clinical_features, wk512, wk16, w23, vec)
    return out_padded[:, :NUM_CLASSES]


def reference_forward(hist, clin, params):
    """Pure-JAX f32 reference (unfused, per-op), mirroring the PyTorch eval forward."""
    def lin(x, w, b):
        return x @ params[w] + params[b]

    hp = lin(hist, "hpw", "hpb")
    cp = lin(clin, "cpw", "cpb")
    # seq_len==1 MHA: softmax over the single key == 1 → out = out_proj(V @ Wv + bv)
    hist_att = lin(lin(lin(cp, "wv", "bv"), "wo", "bo"), "how", "hob")
    clin_att = lin(lin(lin(hp, "wv", "bv"), "wo", "bo"), "cow", "cob")
    hist_final = hist + hist_att
    clin_final = clin + clin_att
    hw = jax.nn.sigmoid(
        jnp.sum(hist_final * params["hgw"], axis=-1, keepdims=True) + params["hgb"])
    cw = jax.nn.sigmoid(
        jnp.sum(clin_final * params["cgw"], axis=-1, keepdims=True) + params["cgb"])
    hist_w = hist_final * hw
    clin_w = clin_final * cw
    x = hist_w @ params["w1h"] + clin_w @ params["w1c"] + params["b1"]
    x = jnp.maximum(x, 0.0) * params["bn1s"] + params["bn1t"]
    x = jnp.maximum(x @ params["w2"] + params["b2"], 0.0) * params["bn2s"] + params["bn2t"]
    return x @ params["w3"] + params["b3"]


if __name__ == "__main__":
    key = jax.random.PRNGKey(0)
    k_hist, k_clin, k_params = jax.random.split(key, 3)

    B = 8
    histology_features = jax.random.normal(k_hist, (B, HIST_DIM), jnp.float32)
    clinical_features = jax.random.normal(k_clin, (B, CLIN_DIM), jnp.float32)

    params = init_params(k_params)
    wk512, wk16, w23, vec = prepare_params(params)

    logits = multimodal_fusion_forward(histology_features, clinical_features,
                                       wk512, wk16, w23, vec)
    jax.block_until_ready(logits)

    assert logits.shape == (B, NUM_CLASSES), logits.shape
    assert bool(jnp.all(jnp.isfinite(logits)))

    ref = reference_forward(histology_features, clinical_features, params)
    max_err = float(jnp.max(jnp.abs(logits - ref)))
    assert max_err < 5e-2, f"max abs err vs reference: {max_err}"

    print("KERNEL_OK")
</pallas_src>

<mosaic_0001>
module attributes {stable_mosaic.version = 11 : i64} {
  func.func @fusion_kernel(%arg0: i32, %arg1: memref<8x512xf32, #tpu.memory_space<vmem>>, %arg2: memref<8x16xf32, #tpu.memory_space<vmem>>, %arg3: memref<512x272xbf16, #tpu.memory_space<vmem>>, %arg4: memref<16x768xbf16, #tpu.memory_space<vmem>>, %arg5: memref<384x128xbf16, #tpu.memory_space<vmem>>, %arg6: memref<1x2048xf32, #tpu.memory_space<vmem>>, %arg7: memref<8x128xf32, #tpu.memory_space<vmem>>) attributes {dimension_semantics = [#tpu.dimension_semantics<parallel>], iteration_bounds = array<i64: 1>, scalar_prefetch = 0 : i64, scratch_operands = 0 : i64, tpu.core_type = #tpu.core_type<tc>, window_params = [{transform_indices = @transform_0, window_bounds = array<i64: 8, 512>}, {transform_indices = @transform_1, window_bounds = array<i64: 8, 16>}, {pipeline_mode = #tpu.pipeline_mode<synchronous>, transform_indices = @transform_2, window_bounds = array<i64: 512, 272>}, {pipeline_mode = #tpu.pipeline_mode<synchronous>, transform_indices = @transform_3, window_bounds = array<i64: 16, 768>}, {pipeline_mode = #tpu.pipeline_mode<synchronous>, transform_indices = @transform_4, window_bounds = array<i64: 384, 128>}, {pipeline_mode = #tpu.pipeline_mode<synchronous>, transform_indices = @transform_5, window_bounds = array<i64: 1, 2048>}, {transform_indices = @transform_6, window_bounds = array<i64: 8, 128>}]} {
    %c0 = arith.constant 0 : index
    %c0_0 = arith.constant 0 : index
    %0 = vector.load %arg1[%c0, %c0_0] : memref<8x512xf32, #tpu.memory_space<vmem>>, vector<8x512xf32>
    %c0_1 = arith.constant 0 : index
    %c0_2 = arith.constant 0 : index
    %1 = vector.load %arg2[%c0_1, %c0_2] : memref<8x16xf32, #tpu.memory_space<vmem>>, vector<8x16xf32>
    %c0_3 = arith.constant 0 : index
    %c0_4 = arith.constant 0 : index
    %2 = vector.load %arg3[%c0_3, %c0_4] : memref<512x272xbf16, #tpu.memory_space<vmem>>, vector<512x256xbf16>
    %c0_5 = arith.constant 0 : index
    %c256 = arith.constant 256 : index
    %3 = vector.load %arg3[%c0_5, %c256] : memref<512x272xbf16, #tpu.memory_space<vmem>>, vector<512x16xbf16>
    %c0_6 = arith.constant 0 : index
    %c0_7 = arith.constant 0 : index
    %4 = vector.load %arg4[%c0_6, %c0_7] : memref<16x768xbf16, #tpu.memory_space<vmem>>, vector<16x512xbf16>
    %c0_8 = arith.constant 0 : index
    %c512 = arith.constant 512 : index
    %5 = vector.load %arg4[%c0_8, %c512] : memref<16x768xbf16, #tpu.memory_space<vmem>>, vector<16x256xbf16>
    %c0_9 = arith.constant 0 : index
    %c0_10 = arith.constant 0 : index
    %6 = vector.load %arg5[%c0_9, %c0_10] : memref<384x128xbf16, #tpu.memory_space<vmem>>, vector<256x128xbf16>
    %c256_11 = arith.constant 256 : index
    %c0_12 = arith.constant 0 : index
    %7 = vector.load %arg5[%c256_11, %c0_12] : memref<384x128xbf16, #tpu.memory_space<vmem>>, vector<128x128xbf16>
    %8 = arith.truncf %1 : vector<8x16xf32> to vector<8x16xbf16>
    %cst = arith.constant dense<0.000000e+00> : vector<8x512xf32>
    %9 = tpu.matmul %8, %4, %cst {dimension_numbers = #tpu.dot_dimension_numbers<[1], [0], [0], [1], [0, 0, 1, 1], [], []>} : vector<8x16xbf16>, vector<16x512xbf16>, vector<8x512xf32> -> vector<8x512xf32>
    %c0_13 = arith.constant 0 : index
    %c0_14 = arith.constant 0 : index
    %10 = vector.load %arg6[%c0_13, %c0_14] : memref<1x2048xf32, #tpu.memory_space<vmem>>, vector<1x512xf32>
    %11 = vector.broadcast %10 : vector<1x512xf32> to vector<8x512xf32>
    %12 = arith.addf %9, %11 : vector<8x512xf32>
    %13 = arith.truncf %0 : vector<8x512xf32> to vector<8x512xbf16>
    %cst_15 = arith.constant dense<0.000000e+00> : vector<8x16xf32>
    %14 = tpu.matmul %13, %3, %cst_15 {dimension_numbers = #tpu.dot_dimension_numbers<[1], [0], [0], [1], [0, 0, 1, 1], [], []>} : vector<8x512xbf16>, vector<512x16xbf16>, vector<8x16xf32> -> vector<8x16xf32>
    %c0_16 = arith.constant 0 : index
    %c512_17 = arith.constant 512 : index
    %15 = vector.load %arg6[%c0_16, %c512_17] : memref<1x2048xf32, #tpu.memory_space<vmem>>, vector<1x16xf32>
    %16 = vector.broadcast %15 : vector<1x16xf32> to vector<8x16xf32>
    %17 = arith.addf %14, %16 : vector<8x16xf32>
    %18 = arith.addf %0, %12 : vector<8x512xf32>
    %19 = arith.addf %1, %17 : vector<8x16xf32>
    %c0_18 = arith.constant 0 : index
    %c640 = arith.constant 640 : index
    %20 = vector.load %arg6[%c0_18, %c640] : memref<1x2048xf32, #tpu.memory_space<vmem>>, vector<1x512xf32>
    %21 = vector.broadcast %20 : vector<1x512xf32> to vector<8x512xf32>
    %22 = arith.mulf %18, %21 : vector<8x512xf32>
    %cst_19 = arith.constant dense<0.000000e+00> : vector<8xf32>
    %23 = vector.multi_reduction <add>, %22, %cst_19 [1] : vector<8x512xf32> to vector<8xf32>
    %24 = vector.shape_cast %23 : vector<8xf32> to vector<8x1xf32>
    %c0_20 = arith.constant 0 : index
    %c1152 = arith.constant 1152 : index
    %25 = vector.load %arg6[%c0_20, %c1152] : memref<1x2048xf32, #tpu.memory_space<vmem>>, vector<1x1xf32>
    %26 = vector.broadcast %25 : vector<1x1xf32> to vector<8x1xf32>
    %27 = arith.addf %24, %26 : vector<8x1xf32>
    %c0_21 = arith.constant 0 : index
    %c1280 = arith.constant 1280 : index
    %28 = vector.load %arg6[%c0_21, %c1280] : memref<1x2048xf32, #tpu.memory_space<vmem>>, vector<1x16xf32>
    %29 = vector.broadcast %28 : vector<1x16xf32> to vector<8x16xf32>
    %30 = arith.mulf %19, %29 : vector<8x16xf32>
    %cst_22 = arith.constant dense<0.000000e+00> : vector<8xf32>
    %31 = vector.multi_reduction <add>, %30, %cst_22 [1] : vector<8x16xf32> to vector<8xf32>
    %32 = vector.shape_cast %31 : vector<8xf32> to vector<8x1xf32>
    %c0_23 = arith.constant 0 : index
    %c1408 = arith.constant 1408 : index
    %33 = vector.load %arg6[%c0_23, %c1408] : memref<1x2048xf32, #tpu.memory_space<vmem>>, vector<1x1xf32>
    %34 = vector.broadcast %33 : vector<1x1xf32> to vector<8x1xf32>
    %35 = arith.addf %32, %34 : vector<8x1xf32>
    %36 = arith.negf %27 : vector<8x1xf32>
    %37 = math.exp %36 : vector<8x1xf32>
    %cst_24 = arith.constant 1.000000e+00 : f32
    %38 = vector.broadcast %cst_24 : f32 to vector<8x1xf32>
    %39 = arith.addf %38, %37 : vector<8x1xf32>
    %40 = arith.divf %38, %39 : vector<8x1xf32>
    %41 = vector.broadcast %40 : vector<8x1xf32> to vector<8x512xf32>
    %42 = arith.mulf %18, %41 : vector<8x512xf32>
    %43 = arith.negf %35 : vector<8x1xf32>
    %44 = math.exp %43 : vector<8x1xf32>
    %cst_25 = arith.constant 1.000000e+00 : f32
    %45 = vector.broadcast %cst_25 : f32 to vector<8x1xf32>
    %46 = arith.addf %45, %44 : vector<8x1xf32>
    %47 = arith.divf %45, %46 : vector<8x1xf32>
    %48 = vector.broadcast %47 : vector<8x1xf32> to vector<8x16xf32>
    %49 = arith.mulf %19, %48 : vector<8x16xf32>
    %50 = arith.truncf %42 : vector<8x512xf32> to vector<8x512xbf16>
    %cst_26 = arith.constant dense<0.000000e+00> : vector<8x256xf32>
    %51 = tpu.matmul %50, %2, %cst_26 {dimension_numbers = #tpu.dot_dimension_numbers<[1], [0], [0], [1], [0, 0, 1, 1], [], []>} : vector<8x512xbf16>, vector<512x256xbf16>, vector<8x256xf32> -> vector<8x256xf32>
    %52 = arith.truncf %49 : vector<8x16xf32> to vector<8x16xbf16>
    %cst_27 = arith.constant dense<0.000000e+00> : vector<8x256xf32>
    %53 = tpu.matmul %52, %5, %cst_27 {dimension_numbers = #tpu.dot_dimension_numbers<[1], [0], [0], [1], [0, 0, 1, 1], [], []>} : vector<8x16xbf16>, vector<16x256xbf16>, vector<8x256xf32> -> vector<8x256xf32>
    %54 = arith.addf %51, %53 : vector<8x256xf32>
    %c0_28 = arith.constant 0 : index
    %c1536 = arith.constant 1536 : index
    %55 = vector.load %arg6[%c0_28, %c1536] : memref<1x2048xf32, #tpu.memory_space<vmem>>, vector<1x256xf32>
    %56 = vector.broadcast %55 : vector<1x256xf32> to vector<8x256xf32>
    %57 = arith.addf %54, %56 : vector<8x256xf32>
    %cst_29 = arith.constant 0.000000e+00 : f32
    %58 = vector.broadcast %cst_29 : f32 to vector<8x256xf32>
    %59 = arith.maximumf %57, %58 : vector<8x256xf32>
    %60 = arith.truncf %59 : vector<8x256xf32> to vector<8x256xbf16>
    %cst_30 = arith.constant dense<0.000000e+00> : vector<8x128xf32>
    %61 = tpu.matmul %60, %6, %cst_30 {dimension_numbers = #tpu.dot_dimension_numbers<[1], [0], [0], [1], [0, 0, 1, 1], [], []>} : vector<8x256xbf16>, vector<256x128xbf16>, vector<8x128xf32> -> vector<8x128xf32>
    %c0_31 = arith.constant 0 : index
    %c1792 = arith.constant 1792 : index
    %62 = vector.load %arg6[%c0_31, %c1792] : memref<1x2048xf32, #tpu.memory_space<vmem>>, vector<1x128xf32>
    %63 = vector.broadcast %62 : vector<1x128xf32> to vector<8x128xf32>
    %64 = arith.addf %61, %63 : vector<8x128xf32>
    %cst_32 = arith.constant 0.000000e+00 : f32
    %65 = vector.broadcast %cst_32 : f32 to vector<8x128xf32>
    %66 = arith.maximumf %64, %65 : vector<8x128xf32>
    %67 = arith.truncf %66 : vector<8x128xf32> to vector<8x128xbf16>
    %cst_33 = arith.constant dense<0.000000e+00> : vector<8x128xf32>
    %68 = tpu.matmul %67, %7, %cst_33 {dimension_numbers = #tpu.dot_dimension_numbers<[1], [0], [0], [1], [0, 0, 1, 1], [], []>} : vector<8x128xbf16>, vector<128x128xbf16>, vector<8x128xf32> -> vector<8x128xf32>
    %c0_34 = arith.constant 0 : index
    %c1920 = arith.constant 1920 : index
    %69 = vector.load %arg6[%c0_34, %c1920] : memref<1x2048xf32, #tpu.memory_space<vmem>>, vector<1x128xf32>
    %70 = vector.broadcast %69 : vector<1x128xf32> to vector<8x128xf32>
    %71 = arith.addf %68, %70 : vector<8x128xf32>
    %c0_35 = arith.constant 0 : index
    %c0_36 = arith.constant 0 : index
    %72 = vector.load %arg7[%c0_35, %c0_36] : memref<8x128xf32, #tpu.memory_space<vmem>>, vector<8x128xf32>
    tpu.vector_store %arg7[%c0_35, %c0_36], %71 {strides = array<i32>} : memref<8x128xf32, #tpu.memory_space<vmem>>, vector<8x128xf32>,
    return
  }
  func.func @transform_0(%arg0: i32) -> (i32, i32) {
    %c0_i32 = arith.constant 0 : i32
    %c0_i32_0 = arith.constant 0 : i32
    return %arg0, %c0_i32 : i32, i32
  }
  func.func @transform_1(%arg0: i32) -> (i32, i32) {
    %c0_i32 = arith.constant 0 : i32
    %c0_i32_0 = arith.constant 0 : i32
    return %arg0, %c0_i32 : i32, i32
  }
  func.func @transform_2(%arg0: i32) -> (i32, i32) {
    %c0_i32 = arith.constant 0 : i32
    %c0_i32_0 = arith.constant 0 : i32
    %c0_i32_1 = arith.constant 0 : i32
    return %c0_i32, %c0_i32_0 : i32, i32
  }
  func.func @transform_3(%arg0: i32) -> (i32, i32) {
    %c0_i32 = arith.constant 0 : i32
    %c0_i32_0 = arith.constant 0 : i32
    %c0_i32_1 = arith.constant 0 : i32
    return %c0_i32, %c0_i32_0 : i32, i32
  }
  func.func @transform_4(%arg0: i32) -> (i32, i32) {
    %c0_i32 = arith.constant 0 : i32
    %c0_i32_0 = arith.constant 0 : i32
    %c0_i32_1 = arith.constant 0 : i32
    return %c0_i32, %c0_i32_0 : i32, i32
  }
  func.func @transform_5(%arg0: i32) -> (i32, i32) {
    %c0_i32 = arith.constant 0 : i32
    %c0_i32_0 = arith.constant 0 : i32
    %c0_i32_1 = arith.constant 0 : i32
    return %c0_i32, %c0_i32_0 : i32, i32
  }
  func.func @transform_6(%arg0: i32) -> (i32, i32) {
    %c0_i32 = arith.constant 0 : i32
    %c0_i32_0 = arith.constant 0 : i32
    return %arg0, %c0_i32 : i32, i32
  }
}

</mosaic_0001>

<llo_original>
// kernel: tpu_custom_call.1
$region0: #{tpu_custom_call.1}
  #allocation0 [shape = 'u32[]', space=smem, size = 0x4, offset = 0x4, fixed_abs, tag = 'smem constant byte address 0x4 - core index']
  #allocation1 [shape = 'u32[144,128]{1,0:T(1,128)}', space=vmem, size = 0x12000, scoped, tag = 'internal scratch']
  %s0 = inlined_call_operand.vmem [shape: f32[8,512], index: 0, kind: input, shape index: {}]
  %s1 = inlined_call_operand.vmem [shape: f32[8,16], index: 1, kind: input, shape index: {}]
  %s2 = inlined_call_operand.vmem [shape: bf16[512,272], index: 2, kind: input, shape index: {}]
  %s3 = inlined_call_operand.vmem [shape: bf16[16,768], index: 3, kind: input, shape index: {}]
  %s4 = inlined_call_operand.vmem [shape: bf16[384,128], index: 4, kind: input, shape index: {}]
  %s5 = inlined_call_operand.vmem [shape: f32[1,2048], index: 5, kind: input, shape index: {}]
  %s6 = inlined_call_operand.hbm [shape: f32[8,128], index: 6, kind: output, shape index: {}]
  %s7 = sld [smem:[#allocation0]]
  $region34: #{tpu_custom_call.1} parent=0
    _
  %s9 = ssub.s32 1, %s7
  %s10 = scalar_select 0, %s9, %s7
  $region1: #{tpu_custom_call.1} parent=0
    #allocation2 [shape = 'u8[4096]{0}', space=vmem, size = 0x1000, scoped, tag = 'output window, operand 0, single buffered']
    #allocation3 [shape = 's32[1]{0}', space=sflag, size = 0x4, scoped, tag = 'scoped memory for tpu_custom_call.1']
    %11 = vsyncpa [#allocation3], 0
    // Predicated region
    $region2: #{tpu_custom_call.1} parent=1 // pred_check
      _
    $region3: #{tpu_custom_call.1} parent=1 // pred_check_branch
      %13 = sbr.rel (0) target = $region5
    $region4: #{tpu_custom_call.1} parent=1 // pred_region
      _
    $region5: #{tpu_custom_call.1} parent=1 // pred_fallthru
      _
    // Predicated region
    $region6: #{tpu_custom_call.1} parent=1 // pred_check
      _
    $region7: #{tpu_custom_call.1} parent=1 // pred_check_branch
      %15 = sbr.rel (0) target = $region9
    $region8: #{tpu_custom_call.1} parent=1 // pred_region
      _
    $region9: #{tpu_custom_call.1} parent=1 // pred_fallthru
      _
    // Predicated region
    $region10: #{tpu_custom_call.1} parent=1 // pred_check
      _
    $region11: #{tpu_custom_call.1} parent=1 // pred_check_branch
      %17 = sbr.rel (0) target = $region13
    $region12: #{tpu_custom_call.1} parent=1 // pred_region
      _
    $region13: #{tpu_custom_call.1} parent=1 // pred_fallthru
      _
    // Predicated region
    $region14: #{tpu_custom_call.1} parent=1 // pred_check
      _
    $region15: #{tpu_custom_call.1} parent=1 // pred_check_branch
      %19 = sbr.rel (0) target = $region17
    $region16: #{tpu_custom_call.1} parent=1 // pred_region
      _
    $region17: #{tpu_custom_call.1} parent=1 // pred_fallthru
      _
    // Predicated region
    $region18: #{tpu_custom_call.1} parent=1 // pred_check
      _
    $region19: #{tpu_custom_call.1} parent=1 // pred_check_branch
      %21 = sbr.rel (0) target = $region21
    $region20: #{tpu_custom_call.1} parent=1 // pred_region
      _
    $region21: #{tpu_custom_call.1} parent=1 // pred_fallthru
      _
    // Predicated region
    $region22: #{tpu_custom_call.1} parent=1 // pred_check
      _
    $region23: #{tpu_custom_call.1} parent=1 // pred_check_branch
      %23 = sbr.rel (0) target = $region25
    $region24: #{tpu_custom_call.1} parent=1 // pred_region
      _
    $region25: #{tpu_custom_call.1} parent=1 // pred_fallthru
      _
    %v25 = vld [vmem:[%s0] sm:$0xff]
    %v26 = vld [vmem:[%s0 + $0x8] sm:$0xff]
    %v27 = vld [vmem:[%s0 + $0x10] sm:$0xff]
    %v28 = vld [vmem:[%s0 + $0x18] sm:$0xff]
    %v29 = vld [vmem:[%s1] sm:$0xff]
    %v30 = vld [vmem:[%s2] sm:$0xff]
    %v31 = vld [vmem:[%s2 + $0xc] sm:$0xff]
    %v32 = vld [vmem:[%s2 + $0x18] sm:$0xff]
    %v33 = vld [vmem:[%s2 + $0x24] sm:$0xff]
    %v34 = vld [vmem:[%s2 + $0x30] sm:$0xff]
    %v35 = vld [vmem:[%s2 + $0x3c] sm:$0xff]
    %v36 = vld [vmem:[%s2 + $0x48] sm:$0xff]
    %v37 = vld [vmem:[%s2 + $0x54] sm:$0xff]
    %v38 = vld [vmem:[%s2 + $0x60] sm:$0xff]
    %v39 = vld [vmem:[%s2 + $0x6c] sm:$0xff]
    %v40 = vld [vmem:[%s2 + $0x78] sm:$0xff]
    %v41 = vld [vmem:[%s2 + $0x84] sm:$0xff]
    %v42 = vld [vmem:[%s2 + $0x90] sm:$0xff]
    %v43 = vld [vmem:[%s2 + $0x9c] sm:$0xff]
    %v44 = vld [vmem:[%s2 + $0xa8] sm:$0xff]
    %v45 = vld [vmem:[%s2 + $0xb4] sm:$0xff]
    %v46 = vld [vmem:[%s2 + $0xc0] sm:$0xff]
    %v47 = vld [vmem:[%s2 + $0xcc] sm:$0xff]
    %v48 = vld [vmem:[%s2 + $0xd8] sm:$0xff]
    %v49 = vld [vmem:[%s2 + $0xe4] sm:$0xff]
    %v50 = vld [vmem:[%s2 + $0xf0] sm:$0xff]
    %v51 = vld [vmem:[%s2 + $0xfc] sm:$0xff]
    %v52 = vld [vmem:[%s2 + $0x108] sm:$0xff]
    %v53 = vld [vmem:[%s2 + $0x114] sm:$0xff]
    %v54 = vld [vmem:[%s2 + $0x120] sm:$0xff]
    %v55 = vld [vmem:[%s2 + $0x12c] sm:$0xff]
    %v56 = vld [vmem:[%s2 + $0x138] sm:$0xff]
    %v57 = vld [vmem:[%s2 + $0x144] sm:$0xff]
    %v58 = vld [vmem:[%s2 + $0x150] sm:$0xff]
    %v59 = vld [vmem:[%s2 + $0x15c] sm:$0xff]
    %v60 = vld [vmem:[%s2 + $0x168] sm:$0xff]
    %v61 = vld [vmem:[%s2 + $0x174] sm:$0xff]
    %v62 = vld [vmem:[%s2 + $0x180] sm:$0xff]
    %v63 = vld [vmem:[%s2 + $0x18c] sm:$0xff]
    %v64 = vld [vmem:[%s2 + $0x198] sm:$0xff]
    %v65 = vld [vmem:[%s2 + $0x1a4] sm:$0xff]
    %v66 = vld [vmem:[%s2 + $0x1b0] sm:$0xff]
    %v67 = vld [vmem:[%s2 + $0x1bc] sm:$0xff]
    %v68 = vld [vmem:[%s2 + $0x1c8] sm:$0xff]
    %v69 = vld [vmem:[%s2 + $0x1d4] sm:$0xff]
    %v70 = vld [vmem:[%s2 + $0x1e0] sm:$0xff]
    %v71 = vld [vmem:[%s2 + $0x1ec] sm:$0xff]
    %v72 = vld [vmem:[%s2 + $0x1f8] sm:$0xff]
    %v73 = vld [vmem:[%s2 + $0x204] sm:$0xff]
    %v74 = vld [vmem:[%s2 + $0x210] sm:$0xff]
    %v75 = vld [vmem:[%s2 + $0x21c] sm:$0xff]
    %v76 = vld [vmem:[%s2 + $0x228] sm:$0xff]
    %v77 = vld [vmem:[%s2 + $0x234] sm:$0xff]
    %v78 = vld [vmem:[%s2 + $0x240] sm:$0xff]
    %v79 = vld [vmem:[%s2 + $0x24c] sm:$0xff]
    %v80 = vld [vmem:[%s2 + $0x258] sm:$0xff]
    %v81 = vld [vmem:[%s2 + $0x264] sm:$0xff]
    %v82 = vld [vmem:[%s2 + $0x270] sm:$0xff]
    %v83 = vld [vmem:[%s2 + $0x27c] sm:$0xff]
    %v84 = vld [vmem:[%s2 + $0x288] sm:$0xff]
    %v85 = vld [vmem:[%s2 + $0x294] sm:$0xff]
    %v86 = vld [vmem:[%s2 + $0x2a0] sm:$0xff]
    %v87 = vld [vmem:[%s2 + $0x2ac] sm:$0xff]
    %v88 = vld [vmem:[%s2 + $0x2b8] sm:$0xff]
    %v89 = vld [vmem:[%s2 + $0x2c4] sm:$0xff]
    %v90 = vld [vmem:[%s2 + $0x2d0] sm:$0xff]
    %v91 = vld [vmem:[%s2 + $0x2dc] sm:$0xff]
    %v92 = vld [vmem:[%s2 + $0x2e8] sm:$0xff]
    %v93 = vld [vmem:[%s2 + $0x2f4] sm:$0xff]
    %v94 = vld [vmem:[%s2 + $0x8] sm:$0xf]
    %v95 = vld [vmem:[%s2 + $0x14] sm:$0xf]
    %v96 = vld [vmem:[%s2 + $0x20] sm:$0xf]
    %v97 = vld [vmem:[%s2 + $0x2c] sm:$0xf]
    %v98 = vld [vmem:[%s2 + $0x38] sm:$0xf]
    %v99 = vld [vmem:[%s2 + $0x44] sm:$0xf]
    %v100 = vld [vmem:[%s2 + $0x50] sm:$0xf]
    %v101 = vld [vmem:[%s2 + $0x5c] sm:$0xf]
    %v102 = vld [vmem:[%s2 + $0x68] sm:$0xf]
    %v103 = vld [vmem:[%s2 + $0x74] sm:$0xf]
    %v104 = vld [vmem:[%s2 + $0x80] sm:$0xf]
    %v105 = vld [vmem:[%s2 + $0x8c] sm:$0xf]
    %v106 = vld [vmem:[%s2 + $0x98] sm:$0xf]
    %v107 = vld [vmem:[%s2 + $0xa4] sm:$0xf]
    %v108 = vld [vmem:[%s2 + $0xb0] sm:$0xf]
    %v109 = vld [vmem:[%s2 + $0xbc] sm:$0xf]
    %v110 = vld [vmem:[%s2 + $0xc8] sm:$0xf]
    %v111 = vld [vmem:[%s2 + $0xd4] sm:$0xf]
    %v112 = vld [vmem:[%s2 + $0xe0] sm:$0xf]
    %v113 = vld [vmem:[%s2 + $0xec] sm:$0xf]
    %v114 = vld [vmem:[%s2 + $0xf8] sm:$0xf]
    %v115 = vld [vmem:[%s2 + $0x104] sm:$0xf]
    %v116 = vld [vmem:[%s2 + $0x110] sm:$0xf]
    %v117 = vld [vmem:[%s2 + $0x11c] sm:$0xf]
    %v118 = vld [vmem:[%s2 + $0x128] sm:$0xf]
    %v119 = vld [vmem:[%s2 + $0x134] sm:$0xf]
    %v120 = vld [vmem:[%s2 + $0x140] sm:$0xf]
    %v121 = vld [vmem:[%s2 + $0x14c] sm:$0xf]
    %v122 = vld [vmem:[%s2 + $0x158] sm:$0xf]
    %v123 = vld [vmem:[%s2 + $0x164] sm:$0xf]
    %v124 = vld [vmem:[%s2 + $0x170] sm:$0xf]
    %v125 = vld [vmem:[%s2 + $0x17c] sm:$0xf]
    %v126 = vld [vmem:[%s2 + $0x188] sm:$0xf]
    %v127 = vld [vmem:[%s2 + $0x194] sm:$0xf]
    %v128 = vld [vmem:[%s2 + $0x1a0] sm:$0xf]
    %v129 = vld [vmem:[%s2 + $0x1ac] sm:$0xf]
    %v130 = vld [vmem:[%s2 + $0x1b8] sm:$0xf]
    %v131 = vld [vmem:[%s2 + $0x1c4] sm:$0xf]
    %v132 = vld [vmem:[%s2 + $0x1d0] sm:$0xf]
    %v133 = vld [vmem:[%s2 + $0x1dc] sm:$0xf]
    %v134 = vld [vmem:[%s2 + $0x1e8] sm:$0xf]
    %v135 = vld [vmem:[%s2 + $0x1f4] sm:$0xf]
    %v136 = vld [vmem:[%s2 + $0x200] sm:$0xf]
    %v137 = vld [vmem:[%s2 + $0x20c] sm:$0xf]
    %v138 = vld [vmem:[%s2 + $0x218] sm:$0xf]
    %v139 = vld [vmem:[%s2 + $0x224] sm:$0xf]
    %v140 = vld [vmem:[%s2 + $0x230] sm:$0xf]
    %v141 = vld [vmem:[%s2 + $0x23c] sm:$0xf]
    %v142 = vld [vmem:[%s2 + $0x248] sm:$0xf]
    %v143 = vld [vmem:[%s2 + $0x254] sm:$0xf]
    %v144 = vld [vmem:[%s2 + $0x260] sm:$0xf]
    %v145 = vld [vmem:[%s2 + $0x26c] sm:$0xf]
    %v146 = vld [vmem:[%s2 + $0x278] sm:$0xf]
    %v147 = vld [vmem:[%s2 + $0x284] sm:$0xf]
    %v148 = vld [vmem:[%s2 + $0x290] sm:$0xf]
    %v149 = vld [vmem:[%s2 + $0x29c] sm:$0xf]
    %v150 = vld [vmem:[%s2 + $0x2a8] sm:$0xf]
    %v151 = vld [vmem:[%s2 + $0x2b4] sm:$0xf]
    %v152 = vld [vmem:[%s2 + $0x2c0] sm:$0xf]
    %v153 = vld [vmem:[%s2 + $0x2cc] sm:$0xf]
    %v154 = vld [vmem:[%s2 + $0x2d8] sm:$0xf]
    %v155 = vld [vmem:[%s2 + $0x2e4] sm:$0xf]
    %v156 = vld [vmem:[%s2 + $0x2f0] sm:$0xf]
    %v157 = vld [vmem:[%s2 + $0x2fc] sm:$0xf]
    %v158 = vld [vmem:[%s3] sm:$0xff]
    %v159 = vld [vmem:[%s3 + $0x8] sm:$0xff]
    %v160 = vld [vmem:[%s3 + $0x18] sm:$0xff]
    %v161 = vld [vmem:[%s3 + $0x20] sm:$0xff]
    %v162 = vld [vmem:[%s3 + $0x10] sm:$0xff]
    %v163 = vld [vmem:[%s3 + $0x28] sm:$0xff]
    %v164 = vld [vmem:[%s4] sm:$0xf]
    %v165 = vld [vmem:[%s4 + $0x4] sm:$0xf]
    %v166 = vld [vmem:[%s4 + $0x8] sm:$0xf]
    %v167 = vld [vmem:[%s4 + $0xc] sm:$0xf]
    %v168 = vld [vmem:[%s4 + $0x10] sm:$0xf]
    %v169 = vld [vmem:[%s4 + $0x14] sm:$0xf]
    %v170 = vld [vmem:[%s4 + $0x18] sm:$0xf]
    %v171 = vld [vmem:[%s4 + $0x1c] sm:$0xf]
    %v172 = vld [vmem:[%s4 + $0x20] sm:$0xf]
    %v173 = vld [vmem:[%s4 + $0x24] sm:$0xf]
    %v174 = vld [vmem:[%s4 + $0x28] sm:$0xf]
    %v175 = vld [vmem:[%s4 + $0x2c] sm:$0xf]
    %v176 = vld [vmem:[%s4 + $0x30] sm:$0xf]
    %v177 = vld [vmem:[%s4 + $0x34] sm:$0xf]
    %v178 = vld [vmem:[%s4 + $0x38] sm:$0xf]
    %v179 = vld [vmem:[%s4 + $0x3c] sm:$0xf]
    %v180 = vld [vmem:[%s4 + $0x40] sm:$0xf]
    %v181 = vld [vmem:[%s4 + $0x44] sm:$0xf]
    %v182 = vld [vmem:[%s4 + $0x48] sm:$0xf]
    %v183 = vld [vmem:[%s4 + $0x4c] sm:$0xf]
    %v184 = vld [vmem:[%s4 + $0x50] sm:$0xf]
    %v185 = vld [vmem:[%s4 + $0x54] sm:$0xf]
    %v186 = vld [vmem:[%s4 + $0x58] sm:$0xf]
    %v187 = vld [vmem:[%s4 + $0x5c] sm:$0xf]
    %v188 = vld [vmem:[%s4 + $0x60] sm:$0xf]
    %v189 = vld [vmem:[%s4 + $0x64] sm:$0xf]
    %v190 = vld [vmem:[%s4 + $0x68] sm:$0xf]
    %v191 = vld [vmem:[%s4 + $0x6c] sm:$0xf]
    %v192 = vld [vmem:[%s4 + $0x70] sm:$0xf]
    %v193 = vld [vmem:[%s4 + $0x74] sm:$0xf]
    %v194 = vld [vmem:[%s4 + $0x78] sm:$0xf]
    %v195 = vld [vmem:[%s4 + $0x7c] sm:$0xf]
    %v196 = vld [vmem:[%s4 + $0x80] sm:$0xf]
    %v197 = vld [vmem:[%s4 + $0x84] sm:$0xf]
    %v198 = vld [vmem:[%s4 + $0x88] sm:$0xf]
    %v199 = vld [vmem:[%s4 + $0x8c] sm:$0xf]
    %v200 = vld [vmem:[%s4 + $0x90] sm:$0xf]
    %v201 = vld [vmem:[%s4 + $0x94] sm:$0xf]
    %v202 = vld [vmem:[%s4 + $0x98] sm:$0xf]
    %v203 = vld [vmem:[%s4 + $0x9c] sm:$0xf]
    %v204 = vld [vmem:[%s4 + $0xa0] sm:$0xf]
    %v205 = vld [vmem:[%s4 + $0xa4] sm:$0xf]
    %v206 = vld [vmem:[%s4 + $0xa8] sm:$0xf]
    %v207 = vld [vmem:[%s4 + $0xac] sm:$0xf]
    %v208 = vld [vmem:[%s4 + $0xb0] sm:$0xf]
    %v209 = vld [vmem:[%s4 + $0xb4] sm:$0xf]
    %v210 = vld [vmem:[%s4 + $0xb8] sm:$0xf]
    %v211 = vld [vmem:[%s4 + $0xbc] sm:$0xf]
    %v212 = vpack.c.bf16 %v29, %v29
    %v213 = vld [vmem:[%s5] sm:$0xf]
    %v215 = vlaneseq
    %v216 = vshrl.u32 %v215, 7
    %v217 = vsub.s32 0, %v216
    %v218 = vrot.slane %v213, %v217
    %v219 = vlaneseq
    %v220 = vshrl.u32 %v219, 7
    %v221 = vsub.s32 1, %v220
    %v222 = vrot.slane %v213, %v221
    %v223 = vlaneseq
    %v224 = vshrl.u32 %v223, 7
    %v225 = vsub.s32 2, %v224
    %v226 = vrot.slane %v213, %v225
    %v227 = vlaneseq
    %v228 = vshrl.u32 %v227, 7
    %v229 = vsub.s32 3, %v228
    %v230 = vrot.slane %v213, %v229
    %v239 = vunpack.c.l.b16 %v158
    %v240 = vunpack.c.h.b16 %v158
    %v241 = vunpack.c.l.b16 %v159
    %v242 = vunpack.c.h.b16 %v159
    %v243 = vunpack.c.l.b16 %v160
    %v244 = vunpack.c.h.b16 %v160
    %v245 = vunpack.c.l.b16 %v161
    %v246 = vunpack.c.h.b16 %v161
    %v247 = vpack.c.b16 %v243, %v239
    %v248 = vpack.c.b16 %v244, %v240
    %v249 = vpack.c.b16 %v245, %v241
    %v250 = vpack.c.b16 %v246, %v242
    %vm255 = vcmask 130048
    %v257 = vsel %vm255, %v212, 0
    %259 = vmatprep.subr.bf16.mxu0 %v248
    %260 = vmatpush1.bf16.msra.mxu0 %v247
    %261 = vmatprep.subr.bf16.mxu0 0
    %262 = vmatpush1.bf16.msra.mxu0 0
    %263 = vmatprep.subr.bf16.mxu0 0
    %264 = vmatpush1.bf16.msra.mxu0 0
    %265 = vmatprep.subr.bf16.mxu0 0
    %266 = vmatpush1.bf16.msra.mxu0 0
    %267 = vmatprep.subr.bf16.mxu0 0
    %268 = vmatpush1.bf16.msra.mxu0 0
    %269 = vmatprep.subr.bf16.mxu0 0
    %270 = vmatpush1.bf16.msra.mxu0 0
    %271 = vmatprep.subr.bf16.mxu0 0
    %272 = vmatpush1.bf16.msra.mxu0 0
    %273 = vmatprep.subr.bf16.mxu0 0
    %274 = vmatpush1.bf16.msra.mxu0 0
    %275 = vmatprep.subr.bf16.mxu0 0
    %276 = vmatpush1.bf16.msra.mxu0 0
    %277 = vmatprep.subr.bf16.mxu0 0
    %278 = vmatpush1.bf16.msra.mxu0 0
    %279 = vmatprep.subr.bf16.mxu0 0
    %280 = vmatpush1.bf16.msra.mxu0 0
    %281 = vmatprep.subr.bf16.mxu0 0
    %282 = vmatpush1.bf16.msra.mxu0 0
    %283 = vmatprep.subr.bf16.mxu0 0
    %284 = vmatpush1.bf16.msra.mxu0 0
    %285 = vmatprep.subr.bf16.mxu0 0
    %286 = vmatpush1.bf16.msra.mxu0 0
    %287 = vmatprep.subr.bf16.mxu0 0
    %288 = vmatpush1.bf16.msra.mxu0 0
    %289 = vmatprep.subr.bf16.mxu0 0
    %290 = vmatpush1.bf16.msra.mxu0 0
    %291 = vmatprep.mubr.bf16.mxu0 0
    %292 = vmatmul.mubr.bf16.gmra.mrb[0].mxu0 %v257
    %v293 = vpop.f32.mrb[0].mxu0
    %v294 = vadd.f32 %v218, %v293
    %v295 = vpop.f32.mrb[0].mxu0
    %v296 = vadd.f32 %v222, %v295
    %v297 = vpop.f32.mrb[0].mxu0
    %v298 = vpop.f32.mrb[0].mxu0
    %299 = vdwg.mxu0
    %300 = vmatprep.subr.bf16.mxu0 %v250
    %301 = vmatpush1.bf16.msra.mxu0 %v249
    %302 = vmatprep.subr.bf16.mxu0 0
    %303 = vmatpush1.bf16.msra.mxu0 0
    %304 = vmatprep.subr.bf16.mxu0 0
    %305 = vmatpush1.bf16.msra.mxu0 0
    %306 = vmatprep.subr.bf16.mxu0 0
    %307 = vmatpush1.bf16.msra.mxu0 0
    %308 = vmatprep.subr.bf16.mxu0 0
    %309 = vmatpush1.bf16.msra.mxu0 0
    %310 = vmatprep.subr.bf16.mxu0 0
    %311 = vmatpush1.bf16.msra.mxu0 0
    %312 = vmatprep.subr.bf16.mxu0 0
    %313 = vmatpush1.bf16.msra.mxu0 0
    %314 = vmatprep.subr.bf16.mxu0 0
    %315 = vmatpush1.bf16.msra.mxu0 0
    %316 = vmatprep.subr.bf16.mxu0 0
    %317 = vmatpush1.bf16.msra.mxu0 0
    %318 = vmatprep.subr.bf16.mxu0 0
    %319 = vmatpush1.bf16.msra.mxu0 0
    %320 = vmatprep.subr.bf16.mxu0 0
    %321 = vmatpush1.bf16.msra.mxu0 0
    %322 = vmatprep.subr.bf16.mxu0 0
    %323 = vmatpush1.bf16.msra.mxu0 0
    %324 = vmatprep.subr.bf16.mxu0 0
    %325 = vmatpush1.bf16.msra.mxu0 0
    %326 = vmatprep.subr.bf16.mxu0 0
    %327 = vmatpush1.bf16.msra.mxu0 0
    %328 = vmatprep.subr.bf16.mxu0 0
    %329 = vmatpush1.bf16.msra.mxu0 0
    %330 = vmatprep.subr.bf16.mxu0 0
    %331 = vmatpush1.bf16.msra.mxu0 0
    %332 = vmatprep.mubr.bf16.mxu0 0
    %333 = vmatmul.mubr.bf16.gmra.mrb[0].mxu0 %v257
    %v334 = vpop.f32.mrb[0].mxu0
    %v335 = vadd.f32 %v226, %v334
    %v336 = vpop.f32.mrb[0].mxu0
    %v337 = vadd.f32 %v230, %v336
    %v338 = vpop.f32.mrb[0].mxu0
    %v339 = vpop.f32.mrb[0].mxu0
    %340 = vdwg.mxu0
    %v341 = vpack.c.bf16 %v25, %v25
    %v342 = vpack.c.bf16 %v26, %v26
    %v343 = vpack.c.bf16 %v27, %v27
    %v344 = vpack.c.bf16 %v28, %v28
    %v345 = vld [vmem:[%s5 + $0x4] sm:$0x1]
    %v347 = vlaneseq
    %v348 = vshrl.u32 %v347, 7
    %v349 = vsub.s32 0, %v348
    %v350 = vrot.slane %v345, %v349
    %v416 = vunpack.c.l.b16 %v94
    %v417 = vunpack.c.l.b16 %v95
    %v418 = vunpack.c.l.b16 %v96
    %v419 = vunpack.c.l.b16 %v97
    %v420 = vunpack.c.l.b16 %v98
    %v421 = vunpack.c.l.b16 %v99
    %v422 = vunpack.c.l.b16 %v100
    %v423 = vunpack.c.l.b16 %v101
    %v424 = vunpack.c.l.b16 %v102
    %v425 = vunpack.c.l.b16 %v103
    %v426 = vunpack.c.l.b16 %v104
    %v427 = vunpack.c.l.b16 %v105
    %v428 = vunpack.c.l.b16 %v106
    %v429 = vunpack.c.l.b16 %v107
    %v430 = vunpack.c.l.b16 %v108
    %v431 = vunpack.c.l.b16 %v109
    %v432 = vunpack.c.l.b16 %v110
    %v433 = vunpack.c.l.b16 %v111
    %v434 = vunpack.c.l.b16 %v112
    %v435 = vunpack.c.l.b16 %v113
    %v436 = vunpack.c.l.b16 %v114
    %v437 = vunpack.c.l.b16 %v115
    %v438 = vunpack.c.l.b16 %v116
    %v439 = vunpack.c.l.b16 %v117
    %v440 = vunpack.c.l.b16 %v118
    %v441 = vunpack.c.l.b16 %v119
    %v442 = vunpack.c.l.b16 %v120
    %v443 = vunpack.c.l.b16 %v121
    %v444 = vunpack.c.l.b16 %v122
    %v445 = vunpack.c.l.b16 %v123
    %v446 = vunpack.c.l.b16 %v124
    %v447 = vunpack.c.l.b16 %v125
    %v448 = vunpack.c.l.b16 %v126
    %v449 = vunpack.c.l.b16 %v127
    %v450 = vunpack.c.l.b16 %v128
    %v451 = vunpack.c.l.b16 %v129
    %v452 = vunpack.c.l.b16 %v130
    %v453 = vunpack.c.l.b16 %v131
    %v454 = vunpack.c.l.b16 %v132
    %v455 = vunpack.c.l.b16 %v133
    %v456 = vunpack.c.l.b16 %v134
    %v457 = vunpack.c.l.b16 %v135
    %v458 = vunpack.c.l.b16 %v136
    %v459 = vunpack.c.l.b16 %v137
    %v460 = vunpack.c.l.b16 %v138
    %v461 = vunpack.c.l.b16 %v139
    %v462 = vunpack.c.l.b16 %v140
    %v463 = vunpack.c.l.b16 %v141
    %v464 = vunpack.c.l.b16 %v142
    %v465 = vunpack.c.l.b16 %v143
    %v466 = vunpack.c.l.b16 %v144
    %v467 = vunpack.c.l.b16 %v145
    %v468 = vunpack.c.l.b16 %v146
    %v469 = vunpack.c.l.b16 %v147
    %v470 = vunpack.c.l.b16 %v148
    %v471 = vunpack.c.l.b16 %v149
    %v472 = vunpack.c.l.b16 %v150
    %v473 = vunpack.c.l.b16 %v151
    %v474 = vunpack.c.l.b16 %v152
    %v475 = vunpack.c.l.b16 %v153
    %v476 = vunpack.c.l.b16 %v154
    %v477 = vunpack.c.l.b16 %v155
    %v478 = vunpack.c.l.b16 %v156
    %v479 = vunpack.c.l.b16 %v157
    %v480 = vpack.c.b16 %v417, %v416
    %v481 = vpack.c.b16 %v419, %v418
    %v482 = vpack.c.b16 %v421, %v420
    %v483 = vpack.c.b16 %v423, %v422
    %v484 = vpack.c.b16 %v425, %v424
    %v485 = vpack.c.b16 %v427, %v426
    %v486 = vpack.c.b16 %v429, %v428
    %v487 = vpack.c.b16 %v431, %v430
    %v488 = vpack.c.b16 %v433, %v432
    %v489 = vpack.c.b16 %v435, %v434
    %v490 = vpack.c.b16 %v437, %v436
    %v491 = vpack.c.b16 %v439, %v438
    %v492 = vpack.c.b16 %v441, %v440
    %v493 = vpack.c.b16 %v443, %v442
    %v494 = vpack.c.b16 %v445, %v444
    %v495 = vpack.c.b16 %v447, %v446
    %v496 = vpack.c.b16 %v449, %v448
    %v497 = vpack.c.b16 %v451, %v450
    %v498 = vpack.c.b16 %v453, %v452
    %v499 = vpack.c.b16 %v455, %v454
    %v500 = vpack.c.b16 %v457, %v456
    %v501 = vpack.c.b16 %v459, %v458
    %v502 = vpack.c.b16 %v461, %v460
    %v503 = vpack.c.b16 %v463, %v462
    %v504 = vpack.c.b16 %v465, %v464
    %v505 = vpack.c.b16 %v467, %v466
    %v506 = vpack.c.b16 %v469, %v468
    %v507 = vpack.c.b16 %v471, %v470
    %v508 = vpack.c.b16 %v473, %v472
    %v509 = vpack.c.b16 %v475, %v474
    %v510 = vpack.c.b16 %v477, %v476
    %v511 = vpack.c.b16 %v479, %v478
    %544 = vmatprep.subr.bf16.mxu0 0
    %545 = vmatpush1.bf16.msra.mxu0 %v480
    %546 = vmatprep.subr.bf16.mxu0 0
    %547 = vmatpush1.bf16.msra.mxu0 %v481
    %548 = vmatprep.subr.bf16.mxu0 0
    %549 = vmatpush1.bf16.msra.mxu0 %v482
    %550 = vmatprep.subr.bf16.mxu0 0
    %551 = vmatpush1.bf16.msra.mxu0 %v483
    %552 = vmatprep.subr.bf16.mxu0 0
    %553 = vmatpush1.bf16.msra.mxu0 %v484
    %554 = vmatprep.subr.bf16.mxu0 0
    %555 = vmatpush1.bf16.msra.mxu0 %v485
    %556 = vmatprep.subr.bf16.mxu0 0
    %557 = vmatpush1.bf16.msra.mxu0 %v486
    %558 = vmatprep.subr.bf16.mxu0 0
    %559 = vmatpush1.bf16.msra.mxu0 %v487
    %560 = vmatprep.subr.bf16.mxu0 0
    %561 = vmatpush1.bf16.msra.mxu0 %v488
    %562 = vmatprep.subr.bf16.mxu0 0
    %563 = vmatpush1.bf16.msra.mxu0 %v489
    %564 = vmatprep.subr.bf16.mxu0 0
    %565 = vmatpush1.bf16.msra.mxu0 %v490
    %566 = vmatprep.subr.bf16.mxu0 0
    %567 = vmatpush1.bf16.msra.mxu0 %v491
    %568 = vmatprep.subr.bf16.mxu0 0
    %569 = vmatpush1.bf16.msra.mxu0 %v492
    %570 = vmatprep.subr.bf16.mxu0 0
    %571 = vmatpush1.bf16.msra.mxu0 %v493
    %572 = vmatprep.subr.bf16.mxu0 0
    %573 = vmatpush1.bf16.msra.mxu0 %v494
    %574 = vmatprep.subr.bf16.mxu0 0
    %575 = vmatpush1.bf16.msra.mxu0 %v495
    %576 = vmatprep.mubr.bf16.mxu0 %v342
    %577 = vmatmul.mubr.bf16.gmra.mrb[0].mxu0 %v341
    %v578 = vpop.f32.mrb[0].mxu0
    %v579 = vadd.f32 %v350, %v578
    %v580 = vpop.f32.mrb[0].mxu0
    %v581 = vpop.f32.mrb[0].mxu0
    %v582 = vpop.f32.mrb[0].mxu0
    %583 = vdwg.mxu0
    %584 = vmatprep.subr.bf16.mxu0 0
    %585 = vmatpush1.bf16.msra.mxu0 %v496
    %586 = vmatprep.subr.bf16.mxu0 0
    %587 = vmatpush1.bf16.msra.mxu0 %v497
    %588 = vmatprep.subr.bf16.mxu0 0
    %589 = vmatpush1.bf16.msra.mxu0 %v498
    %590 = vmatprep.subr.bf16.mxu0 0
    %591 = vmatpush1.bf16.msra.mxu0 %v499
    %592 = vmatprep.subr.bf16.mxu0 0
    %593 = vmatpush1.bf16.msra.mxu0 %v500
    %594 = vmatprep.subr.bf16.mxu0 0
    %595 = vmatpush1.bf16.msra.mxu0 %v501
    %596 = vmatprep.subr.bf16.mxu0 0
    %597 = vmatpush1.bf16.msra.mxu0 %v502
    %598 = vmatprep.subr.bf16.mxu0 0
    %599 = vmatpush1.bf16.msra.mxu0 %v503
    %600 = vmatprep.subr.bf16.mxu0 0
    %601 = vmatpush1.bf16.msra.mxu0 %v504
    %602 = vmatprep.subr.bf16.mxu0 0
    %603 = vmatpush1.bf16.msra.mxu0 %v505
    %604 = vmatprep.subr.bf16.mxu0 0
    %605 = vmatpush1.bf16.msra.mxu0 %v506
    %606 = vmatprep.subr.bf16.mxu0 0
    %607 = vmatpush1.bf16.msra.mxu0 %v507
    %608 = vmatprep.subr.bf16.mxu0 0
    %609 = vmatpush1.bf16.msra.mxu0 %v508
    %610 = vmatprep.subr.bf16.mxu0 0
    %611 = vmatpush1.bf16.msra.mxu0 %v509
    %612 = vmatprep.subr.bf16.mxu0 0
    %613 = vmatpush1.bf16.msra.mxu0 %v510
    %614 = vmatprep.subr.bf16.mxu0 0
    %615 = vmatpush1.bf16.msra.mxu0 %v511
    %616 = vmatprep.mubr.bf16.mxu0 %v344
    %617 = vmatmul.mubr.bf16.gmra.mrb[0].mxu0 %v343
    %v618 = vpop.f32.mrb[0].mxu0
    %v619 = vadd.f32 %v579, %v618
    %v620 = vpop.f32.mrb[0].mxu0
    %v621 = vpop.f32.mrb[0].mxu0
    %v622 = vpop.f32.mrb[0].mxu0
    %623 = vdwg.mxu0
    %v624 = vadd.f32 %v25, %v294
    %v625 = vadd.f32 %v26, %v296
    %v626 = vadd.f32 %v27, %v335
    %v627 = vadd.f32 %v28, %v337
    %v628 = vadd.f32 %v29, %v619
    %v629 = vld [vmem:[%s5 + $0x5] sm:$0xf]
    %v631 = vlaneseq
    %v632 = vshrl.u32 %v631, 7
    %v633 = vsub.s32 0, %v632
    %v634 = vrot.slane %v629, %v633
    %v635 = vlaneseq
    %v636 = vshrl.u32 %v635, 7
    %v637 = vsub.s32 1, %v636
    %v638 = vrot.slane %v629, %v637
    %v639 = vlaneseq
    %v640 = vshrl.u32 %v639, 7
    %v641 = vsub.s32 2, %v640
    %v642 = vrot.slane %v629, %v641
    %v643 = vlaneseq
    %v644 = vshrl.u32 %v643, 7
    %v645 = vsub.s32 3, %v644
    %v646 = vrot.slane %v629, %v645
    %v651 = vmul.f32 %v624, %v634
    %v652 = vmul.f32 %v625, %v638
    %v653 = vmul.f32 %v626, %v642
    %v654 = vmul.f32 %v627, %v646
    %v655 = vadd.f32 %v651, %v652
    %v656 = vadd.f32 %v655, %v653
    %v657 = vadd.f32 %v656, %v654
    %658 = vadd.xlane.f32.xlu0 %v657
    %v659 = vpop.xlane.xlu0 %658
    %v660 = vld [vmem:[%s5 + $0x9] sm:$0x1]
    %v662 = vlaneseq
    %v663 = vshrl.u32 %v662, 7
    %v664 = vsub.s32 0, %v663
    %v665 = vrot.slane %v660, %v664
    %v667 = vadd.f32 %v659, %v665
    %v668 = vld [vmem:[%s5 + $0xa] sm:$0x1]
    %v670 = vlaneseq
    %v671 = vshrl.u32 %v670, 7
    %v672 = vsub.s32 0, %v671
    %v673 = vrot.slane %v668, %v672
    %v675 = vmul.f32 %v628, %v673
    %v676 = vsel %vm255, %v675, 0.0
    %677 = vadd.xlane.f32.xlu0 %v676
    %v678 = vpop.xlane.xlu0 %677
    %v679 = vld [vmem:[%s5 + $0xb] sm:$0x1]
    %v681 = vlaneseq
    %v682 = vshrl.u32 %v681, 7
    %v683 = vsub.s32 0, %v682
    %v684 = vrot.slane %v679, %v683
    %v686 = vadd.f32 %v678, %v684
    %v687 = vxor.u32 %v667, 2147483648
    %v688 = vmul.f32 %v687, 1.442695
    %v689 = vpow.pop %v688
    %v690 = vadd.f32 %v689, 1.0
    %v691 = vrcp.pop %v690
    %v692 = vmul.f32 1.0, %v691
    %694 = vset.pattern.permute.xlu0 0
    %695 = vperm.xlu0 %694, %v692
    %v696 = vpop.permute.xlu0 %695
    %v698 = vmul.f32 %v624, %v696
    %v699 = vmul.f32 %v625, %v696
    %v700 = vmul.f32 %v626, %v696
    %v701 = vmul.f32 %v627, %v696
    %v702 = vxor.u32 %v686, 2147483648
    %v703 = vmul.f32 %v702, 1.442695
    %v704 = vpow.pop %v703
    %v705 = vadd.f32 %v704, 1.0
    %v706 = vrcp.pop %v705
    %v707 = vmul.f32 1.0, %v706
    %709 = vset.pattern.permute.xlu0 0
    %710 = vperm.xlu0 %709, %v707
    %v711 = vpop.permute.xlu0 %710
    %v713 = vmul.f32 %v628, %v711
    %v714 = vpack.c.bf16 %v698, %v698
    %v715 = vpack.c.bf16 %v699, %v699
    %v716 = vpack.c.bf16 %v700, %v700
    %v717 = vpack.c.bf16 %v701, %v701
    %v718 = vpack.c.bf16 %v713, %v713
    %v721 = vunpack.c.l.b16 %v162
    %v722 = vunpack.c.h.b16 %v162
    %v723 = vunpack.c.l.b16 %v163
    %v724 = vunpack.c.h.b16 %v163
    %v725 = vpack.c.b16 %v723, %v721
    %v726 = vpack.c.b16 %v724, %v722
    %v730 = vsel %vm255, %v718, 0
    %732 = vmatprep.subr.bf16.mxu0 %v726
    %733 = vmatpush1.bf16.msra.mxu0 %v725
    %734 = vmatprep.subr.bf16.mxu0 0
    %735 = vmatpush1.bf16.msra.mxu0 0
    %736 = vmatprep.subr.bf16.mxu0 0
    %737 = vmatpush1.bf16.msra.mxu0 0
    %738 = vmatprep.subr.bf16.mxu0 0
    %739 = vmatpush1.bf16.msra.mxu0 0
    %740 = vmatprep.subr.bf16.mxu0 0
    %741 = vmatpush1.bf16.msra.mxu0 0
    %742 = vmatprep.subr.bf16.mxu0 0
    %743 = vmatpush1.bf16.msra.mxu0 0
    %744 = vmatprep.subr.bf16.mxu0 0
    %745 = vmatpush1.bf16.msra.mxu0 0
    %746 = vmatprep.subr.bf16.mxu0 0
    %747 = vmatpush1.bf16.msra.mxu0 0
    %748 = vmatprep.subr.bf16.mxu0 0
    %749 = vmatpush1.bf16.msra.mxu0 0
    %750 = vmatprep.subr.bf16.mxu0 0
    %751 = vmatpush1.bf16.msra.mxu0 0
    %752 = vmatprep.subr.bf16.mxu0 0
    %753 = vmatpush1.bf16.msra.mxu0 0
    %754 = vmatprep.subr.bf16.mxu0 0
    %755 = vmatpush1.bf16.msra.mxu0 0
    %756 = vmatprep.subr.bf16.mxu0 0
    %757 = vmatpush1.bf16.msra.mxu0 0
    %758 = vmatprep.subr.bf16.mxu0 0
    %759 = vmatpush1.bf16.msra.mxu0 0
    %760 = vmatprep.subr.bf16.mxu0 0
    %761 = vmatpush1.bf16.msra.mxu0 0
    %762 = vmatprep.subr.bf16.mxu0 0
    %763 = vmatpush1.bf16.msra.mxu0 0
    %764 = vmatprep.mubr.bf16.mxu0 0
    %765 = vmatmul.mubr.bf16.gmra.mrb[0].mxu0 %v730
    %v766 = vpop.f32.mrb[0].mxu0
    %v767 = vadd.f32 0.0, %v766
    %v768 = vpop.f32.mrb[0].mxu0
    %v769 = vadd.f32 0.0, %v768
    %v770 = vpop.f32.mrb[0].mxu0
    %v771 = vpop.f32.mrb[0].mxu0
    %772 = vdwg.mxu0
    %v837 = vunpack.c.l.b16 %v30
    %v838 = vunpack.c.h.b16 %v30
    %v839 = vunpack.c.l.b16 %v31
    %v840 = vunpack.c.h.b16 %v31
    %v841 = vunpack.c.l.b16 %v32
    %v842 = vunpack.c.h.b16 %v32
    %v843 = vunpack.c.l.b16 %v33
    %v844 = vunpack.c.h.b16 %v33
    %v845 = vunpack.c.l.b16 %v34
    %v846 = vunpack.c.h.b16 %v34
    %v847 = vunpack.c.l.b16 %v35
    %v848 = vunpack.c.h.b16 %v35
    %v849 = vunpack.c.l.b16 %v36
    %v850 = vunpack.c.h.b16 %v36
    %v851 = vunpack.c.l.b16 %v37
    %v852 = vunpack.c.h.b16 %v37
    %v853 = vunpack.c.l.b16 %v38
    %v854 = vunpack.c.h.b16 %v38
    %v855 = vunpack.c.l.b16 %v39
    %v856 = vunpack.c.h.b16 %v39
    %v857 = vunpack.c.l.b16 %v40
    %v858 = vunpack.c.h.b16 %v40
    %v859 = vunpack.c.l.b16 %v41
    %v860 = vunpack.c.h.b16 %v41
    %v861 = vunpack.c.l.b16 %v42
    %v862 = vunpack.c.h.b16 %v42
    %v863 = vunpack.c.l.b16 %v43
    %v864 = vunpack.c.h.b16 %v43
    %v865 = vunpack.c.l.b16 %v44
    %v866 = vunpack.c.h.b16 %v44
    %v867 = vunpack.c.l.b16 %v45
    %v868 = vunpack.c.h.b16 %v45
    %v869 = vunpack.c.l.b16 %v46
    %v870 = vunpack.c.h.b16 %v46
    %v871 = vunpack.c.l.b16 %v47
    %v872 = vunpack.c.h.b16 %v47
    %v873 = vunpack.c.l.b16 %v48
    %v874 = vunpack.c.h.b16 %v48
    %v875 = vunpack.c.l.b16 %v49
    %v876 = vunpack.c.h.b16 %v49
    %v877 = vunpack.c.l.b16 %v50
    %v878 = vunpack.c.h.b16 %v50
    %v879 = vunpack.c.l.b16 %v51
    %v880 = vunpack.c.h.b16 %v51
    %v881 = vunpack.c.l.b16 %v52
    %v882 = vunpack.c.h.b16 %v52
    %v883 = vunpack.c.l.b16 %v53
    %v884 = vunpack.c.h.b16 %v53
    %v885 = vunpack.c.l.b16 %v54
    %v886 = vunpack.c.h.b16 %v54
    %v887 = vunpack.c.l.b16 %v55
    %v888 = vunpack.c.h.b16 %v55
    %v889 = vunpack.c.l.b16 %v56
    %v890 = vunpack.c.h.b16 %v56
    %v891 = vunpack.c.l.b16 %v57
    %v892 = vunpack.c.h.b16 %v57
    %v893 = vunpack.c.l.b16 %v58
    %v894 = vunpack.c.h.b16 %v58
    %v895 = vunpack.c.l.b16 %v59
    %v896 = vunpack.c.h.b16 %v59
    %v897 = vunpack.c.l.b16 %v60
    %v898 = vunpack.c.h.b16 %v60
    %v899 = vunpack.c.l.b16 %v61
    %v900 = vunpack.c.h.b16 %v61
    %v901 = vunpack.c.l.b16 %v62
    %v902 = vunpack.c.h.b16 %v62
    %v903 = vunpack.c.l.b16 %v63
    %v904 = vunpack.c.h.b16 %v63
    %v905 = vunpack.c.l.b16 %v64
    %v906 = vunpack.c.h.b16 %v64
    %v907 = vunpack.c.l.b16 %v65
    %v908 = vunpack.c.h.b16 %v65
    %v909 = vunpack.c.l.b16 %v66
    %v910 = vunpack.c.h.b16 %v66
    %v911 = vunpack.c.l.b16 %v67
    %v912 = vunpack.c.h.b16 %v67
    %v913 = vunpack.c.l.b16 %v68
    %v914 = vunpack.c.h.b16 %v68
    %v915 = vunpack.c.l.b16 %v69
    %v916 = vunpack.c.h.b16 %v69
    %v917 = vunpack.c.l.b16 %v70
    %v918 = vunpack.c.h.b16 %v70
    %v919 = vunpack.c.l.b16 %v71
    %v920 = vunpack.c.h.b16 %v71
    %v921 = vunpack.c.l.b16 %v72
    %v922 = vunpack.c.h.b16 %v72
    %v923 = vunpack.c.l.b16 %v73
    %v924 = vunpack.c.h.b16 %v73
    %v925 = vunpack.c.l.b16 %v74
    %v926 = vunpack.c.h.b16 %v74
    %v927 = vunpack.c.l.b16 %v75
    %v928 = vunpack.c.h.b16 %v75
    %v929 = vunpack.c.l.b16 %v76
    %v930 = vunpack.c.h.b16 %v76
    %v931 = vunpack.c.l.b16 %v77
    %v932 = vunpack.c.h.b16 %v77
    %v933 = vunpack.c.l.b16 %v78
    %v934 = vunpack.c.h.b16 %v78
    %v935 = vunpack.c.l.b16 %v79
    %v936 = vunpack.c.h.b16 %v79
    %v937 = vunpack.c.l.b16 %v80
    %v938 = vunpack.c.h.b16 %v80
    %v939 = vunpack.c.l.b16 %v81
    %v940 = vunpack.c.h.b16 %v81
    %v941 = vunpack.c.l.b16 %v82
    %v942 = vunpack.c.h.b16 %v82
    %v943 = vunpack.c.l.b16 %v83
    %v944 = vunpack.c.h.b16 %v83
    %v945 = vunpack.c.l.b16 %v84
    %v946 = vunpack.c.h.b16 %v84
    %v947 = vunpack.c.l.b16 %v85
    %v948 = vunpack.c.h.b16 %v85
    %v949 = vunpack.c.l.b16 %v86
    %v950 = vunpack.c.h.b16 %v86
    %v951 = vunpack.c.l.b16 %v87
    %v952 = vunpack.c.h.b16 %v87
    %v953 = vunpack.c.l.b16 %v88
    %v954 = vunpack.c.h.b16 %v88
    %v955 = vunpack.c.l.b16 %v89
    %v956 = vunpack.c.h.b16 %v89
    %v957 = vunpack.c.l.b16 %v90
    %v958 = vunpack.c.h.b16 %v90
    %v959 = vunpack.c.l.b16 %v91
    %v960 = vunpack.c.h.b16 %v91
    %v961 = vunpack.c.l.b16 %v92
    %v962 = vunpack.c.h.b16 %v92
    %v963 = vunpack.c.l.b16 %v93
    %v964 = vunpack.c.h.b16 %v93
    %v965 = vpack.c.b16 %v839, %v837
    %v966 = vpack.c.b16 %v840, %v838
    %v967 = vpack.c.b16 %v843, %v841
    %v968 = vpack.c.b16 %v844, %v842
    %v969 = vpack.c.b16 %v847, %v845
    %v970 = vpack.c.b16 %v848, %v846
    %v971 = vpack.c.b16 %v851, %v849
    %v972 = vpack.c.b16 %v852, %v850
    %v973 = vpack.c.b16 %v855, %v853
    %v974 = vpack.c.b16 %v856, %v854
    %v975 = vpack.c.b16 %v859, %v857
    %v976 = vpack.c.b16 %v860, %v858
    %v977 = vpack.c.b16 %v863, %v861
    %v978 = vpack.c.b16 %v864, %v862
    %v979 = vpack.c.b16 %v867, %v865
    %v980 = vpack.c.b16 %v868, %v866
    %v981 = vpack.c.b16 %v871, %v869
    %v982 = vpack.c.b16 %v872, %v870
    %v983 = vpack.c.b16 %v875, %v873
    %v984 = vpack.c.b16 %v876, %v874
    %v985 = vpack.c.b16 %v879, %v877
    %v986 = vpack.c.b16 %v880, %v878
    %v987 = vpack.c.b16 %v883, %v881
    %v988 = vpack.c.b16 %v884, %v882
    %v989 = vpack.c.b16 %v887, %v885
    %v990 = vpack.c.b16 %v888, %v886
    %v991 = vpack.c.b16 %v891, %v889
    %v992 = vpack.c.b16 %v892, %v890
    %v993 = vpack.c.b16 %v895, %v893
    %v994 = vpack.c.b16 %v896, %v894
    %v995 = vpack.c.b16 %v899, %v897
    %v996 = vpack.c.b16 %v900, %v898
    %v997 = vpack.c.b16 %v903, %v901
    %v998 = vpack.c.b16 %v904, %v902
    %v999 = vpack.c.b16 %v907, %v905
    %v1000 = vpack.c.b16 %v908, %v906
    %v1001 = vpack.c.b16 %v911, %v909
    %v1002 = vpack.c.b16 %v912, %v910
    %v1003 = vpack.c.b16 %v915, %v913
    %v1004 = vpack.c.b16 %v916, %v914
    %v1005 = vpack.c.b16 %v919, %v917
    %v1006 = vpack.c.b16 %v920, %v918
    %v1007 = vpack.c.b16 %v923, %v921
    %v1008 = vpack.c.b16 %v924, %v922
    %v1009 = vpack.c.b16 %v927, %v925
    %v1010 = vpack.c.b16 %v928, %v926
    %v1011 = vpack.c.b16 %v931, %v929
    %v1012 = vpack.c.b16 %v932, %v930
    %v1013 = vpack.c.b16 %v935, %v933
    %v1014 = vpack.c.b16 %v936, %v934
    %v1015 = vpack.c.b16 %v939, %v937
    %v1016 = vpack.c.b16 %v940, %v938
    %v1017 = vpack.c.b16 %v943, %v941
    %v1018 = vpack.c.b16 %v944, %v942
    %v1019 = vpack.c.b16 %v947, %v945
    %v1020 = vpack.c.b16 %v948, %v946
    %v1021 = vpack.c.b16 %v951, %v949
    %v1022 = vpack.c.b16 %v952, %v950
    %v1023 = vpack.c.b16 %v955, %v953
    %v1024 = vpack.c.b16 %v956, %v954
    %v1025 = vpack.c.b16 %v959, %v957
    %v1026 = vpack.c.b16 %v960, %v958
    %v1027 = vpack.c.b16 %v963, %v961
    %v1028 = vpack.c.b16 %v964, %v962
    %1093 = vmatprep.subr.bf16.mxu0 %v966
    %1094 = vmatpush1.bf16.msra.mxu0 %v965
    %1095 = vmatprep.subr.bf16.mxu0 %v968
    %1096 = vmatpush1.bf16.msra.mxu0 %v967
    %1097 = vmatprep.subr.bf16.mxu0 %v970
    %1098 = vmatpush1.bf16.msra.mxu0 %v969
    %1099 = vmatprep.subr.bf16.mxu0 %v972
    %1100 = vmatpush1.bf16.msra.mxu0 %v971
    %1101 = vmatprep.subr.bf16.mxu0 %v974
    %1102 = vmatpush1.bf16.msra.mxu0 %v973
    %1103 = vmatprep.subr.bf16.mxu0 %v976
    %1104 = vmatpush1.bf16.msra.mxu0 %v975
    %1105 = vmatprep.subr.bf16.mxu0 %v978
    %1106 = vmatpush1.bf16.msra.mxu0 %v977
    %1107 = vmatprep.subr.bf16.mxu0 %v980
    %1108 = vmatpush1.bf16.msra.mxu0 %v979
    %1109 = vmatprep.subr.bf16.mxu0 %v982
    %1110 = vmatpush1.bf16.msra.mxu0 %v981
    %1111 = vmatprep.subr.bf16.mxu0 %v984
    %1112 = vmatpush1.bf16.msra.mxu0 %v983
    %1113 = vmatprep.subr.bf16.mxu0 %v986
    %1114 = vmatpush1.bf16.msra.mxu0 %v985
    %1115 = vmatprep.subr.bf16.mxu0 %v988
    %1116 = vmatpush1.bf16.msra.mxu0 %v987
    %1117 = vmatprep.subr.bf16.mxu0 %v990
    %1118 = vmatpush1.bf16.msra.mxu0 %v989
    %1119 = vmatprep.subr.bf16.mxu0 %v992
    %1120 = vmatpush1.bf16.msra.mxu0 %v991
    %1121 = vmatprep.subr.bf16.mxu0 %v994
    %1122 = vmatpush1.bf16.msra.mxu0 %v993
    %1123 = vmatprep.subr.bf16.mxu0 %v996
    %1124 = vmatpush1.bf16.msra.mxu0 %v995
    %1125 = vmatprep.mubr.bf16.mxu0 %v715
    %1126 = vmatmul.mubr.bf16.gmra.mrb[0].mxu0 %v714
    %v1127 = vpop.f32.mrb[0].mxu0
    %v1128 = vadd.f32 %v767, %v1127
    %v1129 = vpop.f32.mrb[0].mxu0
    %v1130 = vadd.f32 %v769, %v1129
    %v1131 = vpop.f32.mrb[0].mxu0
    %v1132 = vpop.f32.mrb[0].mxu0
    %1133 = vdwg.mxu0
    %1134 = vmatprep.subr.bf16.mxu0 %v998
    %1135 = vmatpush1.bf16.msra.mxu0 %v997
    %1136 = vmatprep.subr.bf16.mxu0 %v1000
    %1137 = vmatpush1.bf16.msra.mxu0 %v999
    %1138 = vmatprep.subr.bf16.mxu0 %v1002
    %1139 = vmatpush1.bf16.msra.mxu0 %v1001
    %1140 = vmatprep.subr.bf16.mxu0 %v1004
    %1141 = vmatpush1.bf16.msra.mxu0 %v1003
    %1142 = vmatprep.subr.bf16.mxu0 %v1006
    %1143 = vmatpush1.bf16.msra.mxu0 %v1005
    %1144 = vmatprep.subr.bf16.mxu0 %v1008
    %1145 = vmatpush1.bf16.msra.mxu0 %v1007
    %1146 = vmatprep.subr.bf16.mxu0 %v1010
    %1147 = vmatpush1.bf16.msra.mxu0 %v1009
    %1148 = vmatprep.subr.bf16.mxu0 %v1012
    %1149 = vmatpush1.bf16.msra.mxu0 %v1011
    %1150 = vmatprep.subr.bf16.mxu0 %v1014
    %1151 = vmatpush1.bf16.msra.mxu0 %v1013
    %1152 = vmatprep.subr.bf16.mxu0 %v1016
    %1153 = vmatpush1.bf16.msra.mxu0 %v1015
    %1154 = vmatprep.subr.bf16.mxu0 %v1018
    %1155 = vmatpush1.bf16.msra.mxu0 %v1017
    %1156 = vmatprep.subr.bf16.mxu0 %v1020
    %1157 = vmatpush1.bf16.msra.mxu0 %v1019
    %1158 = vmatprep.subr.bf16.mxu0 %v1022
    %1159 = vmatpush1.bf16.msra.mxu0 %v1021
    %1160 = vmatprep.subr.bf16.mxu0 %v1024
    %1161 = vmatpush1.bf16.msra.mxu0 %v1023
    %1162 = vmatprep.subr.bf16.mxu0 %v1026
    %1163 = vmatpush1.bf16.msra.mxu0 %v1025
    %1164 = vmatprep.subr.bf16.mxu0 %v1028
    %1165 = vmatpush1.bf16.msra.mxu0 %v1027
    %1166 = vmatprep.mubr.bf16.mxu0 %v717
    %1167 = vmatmul.mubr.bf16.gmra.mrb[0].mxu0 %v716
    %v1168 = vpop.f32.mrb[0].mxu0
    %v1169 = vadd.f32 %v1128, %v1168
    %v1170 = vpop.f32.mrb[0].mxu0
    %v1171 = vadd.f32 %v1130, %v1170
    %v1172 = vpop.f32.mrb[0].mxu0
    %v1173 = vpop.f32.mrb[0].mxu0
    %1174 = vdwg.mxu0
    %v1175 = vld [vmem:[%s5 + $0xc] sm:$0x3]
    %v1177 = vlaneseq
    %v1178 = vshrl.u32 %v1177, 7
    %v1179 = vsub.s32 0, %v1178
    %v1180 = vrot.slane %v1175, %v1179
    %v1181 = vlaneseq
    %v1182 = vshrl.u32 %v1181, 7
    %v1183 = vsub.s32 1, %v1182
    %v1184 = vrot.slane %v1175, %v1183
    %v1187 = vadd.f32 %v1169, %v1180
    %v1188 = vadd.f32 %v1171, %v1184
    %v1189 = vmax.f32 %v1187, 0.0
    %v1190 = vmax.f32 %v1188, 0.0
    %v1191 = vpack.c.bf16 %v1189, %v1189
    %v1192 = vpack.c.bf16 %v1190, %v1190
    %v1193 = vld [vmem:[%s5 + $0xe] sm:$0x1]
    %v1195 = vlaneseq
    %v1196 = vshrl.u32 %v1195, 7
    %v1197 = vsub.s32 0, %v1196
    %v1198 = vrot.slane %v1193, %v1197
    %v1232 = vunpack.c.l.b16 %v164
    %v1233 = vunpack.c.l.b16 %v165
    %v1234 = vunpack.c.l.b16 %v166
    %v1235 = vunpack.c.l.b16 %v167
    %v1236 = vunpack.c.l.b16 %v168
    %v1237 = vunpack.c.l.b16 %v169
    %v1238 = vunpack.c.l.b16 %v170
    %v1239 = vunpack.c.l.b16 %v171
    %v1240 = vunpack.c.l.b16 %v172
    %v1241 = vunpack.c.l.b16 %v173
    %v1242 = vunpack.c.l.b16 %v174
    %v1243 = vunpack.c.l.b16 %v175
    %v1244 = vunpack.c.l.b16 %v176
    %v1245 = vunpack.c.l.b16 %v177
    %v1246 = vunpack.c.l.b16 %v178
    %v1247 = vunpack.c.l.b16 %v179
    %v1248 = vunpack.c.l.b16 %v180
    %v1249 = vunpack.c.l.b16 %v181
    %v1250 = vunpack.c.l.b16 %v182
    %v1251 = vunpack.c.l.b16 %v183
    %v1252 = vunpack.c.l.b16 %v184
    %v1253 = vunpack.c.l.b16 %v185
    %v1254 = vunpack.c.l.b16 %v186
    %v1255 = vunpack.c.l.b16 %v187
    %v1256 = vunpack.c.l.b16 %v188
    %v1257 = vunpack.c.l.b16 %v189
    %v1258 = vunpack.c.l.b16 %v190
    %v1259 = vunpack.c.l.b16 %v191
    %v1260 = vunpack.c.l.b16 %v192
    %v1261 = vunpack.c.l.b16 %v193
    %v1262 = vunpack.c.l.b16 %v194
    %v1263 = vunpack.c.l.b16 %v195
    %v1264 = vpack.c.b16 %v1233, %v1232
    %v1265 = vpack.c.b16 %v1235, %v1234
    %v1266 = vpack.c.b16 %v1237, %v1236
    %v1267 = vpack.c.b16 %v1239, %v1238
    %v1268 = vpack.c.b16 %v1241, %v1240
    %v1269 = vpack.c.b16 %v1243, %v1242
    %v1270 = vpack.c.b16 %v1245, %v1244
    %v1271 = vpack.c.b16 %v1247, %v1246
    %v1272 = vpack.c.b16 %v1249, %v1248
    %v1273 = vpack.c.b16 %v1251, %v1250
    %v1274 = vpack.c.b16 %v1253, %v1252
    %v1275 = vpack.c.b16 %v1255, %v1254
    %v1276 = vpack.c.b16 %v1257, %v1256
    %v1277 = vpack.c.b16 %v1259, %v1258
    %v1278 = vpack.c.b16 %v1261, %v1260
    %v1279 = vpack.c.b16 %v1263, %v1262
    %1296 = vmatprep.subr.bf16.mxu0 0
    %1297 = vmatpush1.bf16.msra.mxu0 %v1264
    %1298 = vmatprep.subr.bf16.mxu0 0
    %1299 = vmatpush1.bf16.msra.mxu0 %v1265
    %1300 = vmatprep.subr.bf16.mxu0 0
    %1301 = vmatpush1.bf16.msra.mxu0 %v1266
    %1302 = vmatprep.subr.bf16.mxu0 0
    %1303 = vmatpush1.bf16.msra.mxu0 %v1267
    %1304 = vmatprep.subr.bf16.mxu0 0
    %1305 = vmatpush1.bf16.msra.mxu0 %v1268
    %1306 = vmatprep.subr.bf16.mxu0 0
    %1307 = vmatpush1.bf16.msra.mxu0 %v1269
    %1308 = vmatprep.subr.bf16.mxu0 0
    %1309 = vmatpush1.bf16.msra.mxu0 %v1270
    %1310 = vmatprep.subr.bf16.mxu0 0
    %1311 = vmatpush1.bf16.msra.mxu0 %v1271
    %1312 = vmatprep.subr.bf16.mxu0 0
    %1313 = vmatpush1.bf16.msra.mxu0 %v1272
    %1314 = vmatprep.subr.bf16.mxu0 0
    %1315 = vmatpush1.bf16.msra.mxu0 %v1273
    %1316 = vmatprep.subr.bf16.mxu0 0
    %1317 = vmatpush1.bf16.msra.mxu0 %v1274
    %1318 = vmatprep.subr.bf16.mxu0 0
    %1319 = vmatpush1.bf16.msra.mxu0 %v1275
    %1320 = vmatprep.subr.bf16.mxu0 0
    %1321 = vmatpush1.bf16.msra.mxu0 %v1276
    %1322 = vmatprep.subr.bf16.mxu0 0
    %1323 = vmatpush1.bf16.msra.mxu0 %v1277
    %1324 = vmatprep.subr.bf16.mxu0 0
    %1325 = vmatpush1.bf16.msra.mxu0 %v1278
    %1326 = vmatprep.subr.bf16.mxu0 0
    %1327 = vmatpush1.bf16.msra.mxu0 %v1279
    %1328 = vmatprep.mubr.bf16.mxu0 %v1192
    %1329 = vmatmul.mubr.bf16.gmra.mrb[0].mxu0 %v1191
    %v1330 = vpop.f32.mrb[0].mxu0
    %v1331 = vadd.f32 %v1198, %v1330
    %v1332 = vpop.f32.mrb[0].mxu0
    %v1333 = vpop.f32.mrb[0].mxu0
    %v1334 = vpop.f32.mrb[0].mxu0
    %1335 = vdwg.mxu0
    %v1336 = vmax.f32 %v1331, 0.0
    %v1337 = vpack.c.bf16 %v1336, %v1336
    %v1338 = vld [vmem:[%s5 + $0xf] sm:$0x1]
    %v1340 = vlaneseq
    %v1341 = vshrl.u32 %v1340, 7
    %v1342 = vsub.s32 0, %v1341
    %v1343 = vrot.slane %v1338, %v1342
    %v1361 = vunpack.c.l.b16 %v196
    %v1362 = vunpack.c.l.b16 %v197
    %v1363 = vunpack.c.l.b16 %v198
    %v1364 = vunpack.c.l.b16 %v199
    %v1365 = vunpack.c.l.b16 %v200
    %v1366 = vunpack.c.l.b16 %v201
    %v1367 = vunpack.c.l.b16 %v202
    %v1368 = vunpack.c.l.b16 %v203
    %v1369 = vunpack.c.l.b16 %v204
    %v1370 = vunpack.c.l.b16 %v205
    %v1371 = vunpack.c.l.b16 %v206
    %v1372 = vunpack.c.l.b16 %v207
    %v1373 = vunpack.c.l.b16 %v208
    %v1374 = vunpack.c.l.b16 %v209
    %v1375 = vunpack.c.l.b16 %v210
    %v1376 = vunpack.c.l.b16 %v211
    %v1377 = vpack.c.b16 %v1362, %v1361
    %v1378 = vpack.c.b16 %v1364, %v1363
    %v1379 = vpack.c.b16 %v1366, %v1365
    %v1380 = vpack.c.b16 %v1368, %v1367
    %v1381 = vpack.c.b16 %v1370, %v1369
    %v1382 = vpack.c.b16 %v1372, %v1371
    %v1383 = vpack.c.b16 %v1374, %v1373
    %v1384 = vpack.c.b16 %v1376, %v1375
    %1393 = vmatprep.subr.bf16.mxu0 0
    %1394 = vmatpush1.bf16.msra.mxu0 %v1377
    %1395 = vmatprep.subr.bf16.mxu0 0
    %1396 = vmatpush1.bf16.msra.mxu0 %v1378
    %1397 = vmatprep.subr.bf16.mxu0 0
    %1398 = vmatpush1.bf16.msra.mxu0 %v1379
    %1399 = vmatprep.subr.bf16.mxu0 0
    %1400 = vmatpush1.bf16.msra.mxu0 %v1380
    %1401 = vmatprep.subr.bf16.mxu0 0
    %1402 = vmatpush1.bf16.msra.mxu0 %v1381
    %1403 = vmatprep.subr.bf16.mxu0 0
    %1404 = vmatpush1.bf16.msra.mxu0 %v1382
    %1405 = vmatprep.subr.bf16.mxu0 0
    %1406 = vmatpush1.bf16.msra.mxu0 %v1383
    %1407 = vmatprep.subr.bf16.mxu0 0
    %1408 = vmatpush1.bf16.msra.mxu0 %v1384
    %1409 = vmatprep.subr.bf16.mxu0 0
    %1410 = vmatpush1.bf16.msra.mxu0 0
    %1411 = vmatprep.subr.bf16.mxu0 0
    %1412 = vmatpush1.bf16.msra.mxu0 0
    %1413 = vmatprep.subr.bf16.mxu0 0
    %1414 = vmatpush1.bf16.msra.mxu0 0
    %1415 = vmatprep.subr.bf16.mxu0 0
    %1416 = vmatpush1.bf16.msra.mxu0 0
    %1417 = vmatprep.subr.bf16.mxu0 0
    %1418 = vmatpush1.bf16.msra.mxu0 0
    %1419 = vmatprep.subr.bf16.mxu0 0
    %1420 = vmatpush1.bf16.msra.mxu0 0
    %1421 = vmatprep.subr.bf16.mxu0 0
    %1422 = vmatpush1.bf16.msra.mxu0 0
    %1423 = vmatprep.subr.bf16.mxu0 0
    %1424 = vmatpush1.bf16.msra.mxu0 0
    %1425 = vmatprep.mubr.bf16.mxu0 0
    %1426 = vmatmul.mubr.bf16.gmra.mrb[0].mxu0 %v1337
    %v1427 = vpop.f32.mrb[0].mxu0
    %v1428 = vadd.f32 %v1343, %v1427
    %v1429 = vpop.f32.mrb[0].mxu0
    %v1430 = vpop.f32.mrb[0].mxu0
    %v1431 = vpop.f32.mrb[0].mxu0
    %1432 = vdwg.mxu0
    %1433 = vst [vmem:[#allocation2] sm:$0xff] %v1428
    // Predicated region
    $region26: #{tpu_custom_call.1} parent=1 // pred_check
      _
    $region27: #{tpu_custom_call.1} parent=1 // pred_check_branch
      %1435 = sbr.rel (0) target = $region29
    $region28: #{tpu_custom_call.1} parent=1 // pred_region
      %s1437 = ssub.s32 128, 128
      %1438 = vsyncadd [#allocation3], %s1437
      %s1440 = sshll.u32 [#allocation2], 4
      %s1441 = int_to_ptr.vmem [resolvable:$true] %s1440
      %1443 = dma.vmem_to_hbm [thread:$0]  %s1441, 128, %s6, [#allocation3]
    $region29: #{tpu_custom_call.1} parent=1 // pred_fallthru
      _
    // Predicated region
    $region30: #{tpu_custom_call.1} parent=1 // pred_check
      _
    $region31: #{tpu_custom_call.1} parent=1 // pred_check_branch
      %1445 = sbr.rel (0) target = $region33
    $region32: #{tpu_custom_call.1} parent=1 // pred_region
      %1446 = dma.done [#allocation3], 128
    $region33: #{tpu_custom_call.1} parent=1 // pred_fallthru
      _
    %1447 = vsyncpa [#allocation3], 1

</llo_original>
